<compile_context>
chip_gen: v7x
topology: tpu7x:2x2x1
jax: 0.10.0
libtpu: 0.0.40
codegen_flags: <defaults>
</compile_context>

<pallas_src>
import functools

import jax
import jax.numpy as jnp
from jax.experimental import pallas as pl
from jax.experimental.pallas import tpu as pltpu

N_IN = 4          # iris features
N_CLASSES = 3     # iris classes
CLASS_PAD = 128   # pad class dim to one full lane width for dense stores
TB_MAX = 256      # batch tile (MXU M dim on v6e/v7x); multiples of 8 below that for small B


def _round_up(a, m):
    return ((a + m - 1) // m) * m


def irisnet_kernel(x_ref, w1_ref, b1_ref, w2_ref, b2_ref, w3_ref, b3_ref, o_ref):
    x = x_ref[...]                                                       # (TB, 4) f32

    # fc1 + sigmoid  (bf16 MXU inputs, f32 accumulate, f32 elementwise)
    h1 = jnp.dot(x.astype(jnp.bfloat16), w1_ref[...],
                 preferred_element_type=jnp.float32) + b1_ref[...]       # (TB, H)
    h1 = jax.nn.sigmoid(h1)

    # fc2 + sigmoid
    h2 = jnp.dot(h1.astype(jnp.bfloat16), w2_ref[...],
                 preferred_element_type=jnp.float32) + b2_ref[...]       # (TB, H)
    h2 = jax.nn.sigmoid(h2)

    # fc3 (class dim padded to 128; padded columns have -1e30 bias -> softmax prob 0)
    logits = jnp.dot(h2.astype(jnp.bfloat16), w3_ref[...],
                     preferred_element_type=jnp.float32) + b3_ref[...]   # (TB, 128)

    # softmax over the class axis, numerically stable; reciprocal on the EUP slot
    m = jnp.max(logits, axis=-1, keepdims=True)
    e = jnp.exp(logits - m)
    inv = pl.reciprocal(jnp.sum(e, axis=-1, keepdims=True), approx=True)
    o_ref[...] = e * inv


def irisnet_forward(x, w1, b1, w2, b2, w3p, b3p):
    B = x.shape[0]
    H = w1.shape[1]
    C = w3p.shape[1]

    # Batch tile: multiple of 8 (sublane), capped at TB_MAX; pad batch to a whole number of tiles.
    tb = min(TB_MAX, _round_up(B, 8))
    b_pad = _round_up(B, tb)
    if b_pad != B:
        x = jnp.pad(x, ((0, b_pad - B), (0, 0)))
    num_tiles = b_pad // tb

    const = lambda i: (0, 0)   # weights/biases: same block every step -> resident in VMEM
    tiled = lambda i: (i, 0)   # activations/output: stream batch tiles

    out_padded = pl.pallas_call(
        irisnet_kernel,
        out_shape=jax.ShapeDtypeStruct((b_pad, C), jnp.float32),
        grid=(num_tiles,),
        in_specs=[
            pl.BlockSpec((tb, N_IN), tiled),
            pl.BlockSpec((N_IN, H), const),
            pl.BlockSpec((1, H), const),
            pl.BlockSpec((H, H), const),
            pl.BlockSpec((1, H), const),
            pl.BlockSpec((H, C), const),
            pl.BlockSpec((1, C), const),
        ],
        out_specs=pl.BlockSpec((tb, C), tiled),
        compiler_params=pltpu.CompilerParams(dimension_semantics=("parallel",)),
    )(x, w1, b1, w2, b2, w3p, b3p)

    return out_padded[:B, :N_CLASSES]


def init_params(key, n_hidden):
    # Deterministic synthetic init mimicking nn.Linear shapes:
    #   fc1: (4 -> H), fc2: (H -> H), fc3: (H -> 3)
    # Weights stored transposed (in, out) in bf16 for the MXU; biases kept f32 (1, out).
    k1, k2, k3, k4, k5, k6 = jax.random.split(key, 6)
    w1 = (jax.random.normal(k1, (N_IN, n_hidden), jnp.float32) * 0.5).astype(jnp.bfloat16)
    b1 = jax.random.normal(k2, (1, n_hidden), jnp.float32) * 0.1
    w2 = (jax.random.normal(k3, (n_hidden, n_hidden), jnp.float32) * 0.2).astype(jnp.bfloat16)
    b2 = jax.random.normal(k4, (1, n_hidden), jnp.float32) * 0.1
    w3 = jax.random.normal(k5, (n_hidden, N_CLASSES), jnp.float32) * 0.3
    b3 = jax.random.normal(k6, (1, N_CLASSES), jnp.float32) * 0.1

    # Pad the class dim to a full 128-lane slab for dense stores. Padded columns: zero weights,
    # -1e30 bias -> exp underflows to exactly 0 -> softmax over real classes is unchanged.
    w3p = jnp.zeros((n_hidden, CLASS_PAD), jnp.float32).at[:, :N_CLASSES].set(w3).astype(jnp.bfloat16)
    b3p = jnp.full((1, CLASS_PAD), -1e30, jnp.float32).at[:, :N_CLASSES].set(b3)
    return w1, b1, w2, b2, w3p, b3p


def reference_forward(x, w1, b1, w2, b2, w3p, b3p):
    # Pure-JAX reference mirroring the kernel's numerics (bf16 matmul inputs, f32 accumulate,
    # f32 elementwise), restricted to the real classes.
    f32 = jnp.float32
    h1 = jax.nn.sigmoid(jnp.dot(x.astype(jnp.bfloat16), w1, preferred_element_type=f32) + b1)
    h2 = jax.nn.sigmoid(jnp.dot(h1.astype(jnp.bfloat16), w2, preferred_element_type=f32) + b2)
    logits = (jnp.dot(h2.astype(jnp.bfloat16), w3p[:, :N_CLASSES], preferred_element_type=f32)
              + b3p[:, :N_CLASSES])
    return jax.nn.softmax(logits, axis=1)


if __name__ == "__main__":
    key = jax.random.PRNGKey(0)
    kx, kp = jax.random.split(key)

    batch = 8
    n_hidden = 32

    x = jax.random.normal(kx, (batch, N_IN), jnp.float32)
    params = init_params(kp, n_hidden)

    out = irisnet_forward(x, *params)
    jax.block_until_ready(out)

    ref = reference_forward(x, *params)
    assert out.shape == (batch, N_CLASSES)
    assert jnp.allclose(out, ref, atol=1e-2, rtol=1e-2), \
        f"max abs err {jnp.max(jnp.abs(out - ref))}"
    # softmax rows sum to ~1 (approx reciprocal -> loose tolerance)
    assert jnp.allclose(jnp.sum(out, axis=1), jnp.ones((batch,)), atol=1e-2)

    print("KERNEL_OK")
</pallas_src>

<mosaic_0001>
module attributes {stable_mosaic.version = 11 : i64} {
  func.func @irisnet_kernel(%arg0: i32, %arg1: memref<8x4xf32, #tpu.memory_space<vmem>>, %arg2: memref<4x32xbf16, #tpu.memory_space<vmem>>, %arg3: memref<1x32xf32, #tpu.memory_space<vmem>>, %arg4: memref<32x32xbf16, #tpu.memory_space<vmem>>, %arg5: memref<1x32xf32, #tpu.memory_space<vmem>>, %arg6: memref<32x128xbf16, #tpu.memory_space<vmem>>, %arg7: memref<1x128xf32, #tpu.memory_space<vmem>>, %arg8: memref<8x128xf32, #tpu.memory_space<vmem>>) attributes {dimension_semantics = [#tpu.dimension_semantics<parallel>], iteration_bounds = array<i64: 1>, scalar_prefetch = 0 : i64, scratch_operands = 0 : i64, tpu.core_type = #tpu.core_type<tc>, window_params = [{transform_indices = @transform_0, window_bounds = array<i64: 8, 4>}, {pipeline_mode = #tpu.pipeline_mode<synchronous>, transform_indices = @transform_1, window_bounds = array<i64: 4, 32>}, {pipeline_mode = #tpu.pipeline_mode<synchronous>, transform_indices = @transform_2, window_bounds = array<i64: 1, 32>}, {pipeline_mode = #tpu.pipeline_mode<synchronous>, transform_indices = @transform_3, window_bounds = array<i64: 32, 32>}, {pipeline_mode = #tpu.pipeline_mode<synchronous>, transform_indices = @transform_4, window_bounds = array<i64: 1, 32>}, {pipeline_mode = #tpu.pipeline_mode<synchronous>, transform_indices = @transform_5, window_bounds = array<i64: 32, 128>}, {pipeline_mode = #tpu.pipeline_mode<synchronous>, transform_indices = @transform_6, window_bounds = array<i64: 1, 128>}, {transform_indices = @transform_7, window_bounds = array<i64: 8, 128>}]} {
    %c0 = arith.constant 0 : index
    %c0_0 = arith.constant 0 : index
    %0 = vector.load %arg1[%c0, %c0_0] : memref<8x4xf32, #tpu.memory_space<vmem>>, vector<8x4xf32>
    %1 = arith.truncf %0 : vector<8x4xf32> to vector<8x4xbf16>
    %c0_1 = arith.constant 0 : index
    %c0_2 = arith.constant 0 : index
    %2 = vector.load %arg2[%c0_1, %c0_2] : memref<4x32xbf16, #tpu.memory_space<vmem>>, vector<4x32xbf16>
    %cst = arith.constant dense<0.000000e+00> : vector<8x32xf32>
    %3 = tpu.matmul %1, %2, %cst {dimension_numbers = #tpu.dot_dimension_numbers<[1], [0], [0], [1], [0, 0, 1, 1], [], []>} : vector<8x4xbf16>, vector<4x32xbf16>, vector<8x32xf32> -> vector<8x32xf32>
    %c0_3 = arith.constant 0 : index
    %c0_4 = arith.constant 0 : index
    %4 = vector.load %arg3[%c0_3, %c0_4] : memref<1x32xf32, #tpu.memory_space<vmem>>, vector<1x32xf32>
    %5 = vector.broadcast %4 : vector<1x32xf32> to vector<8x32xf32>
    %6 = arith.addf %3, %5 : vector<8x32xf32>
    %7 = arith.negf %6 : vector<8x32xf32>
    %8 = math.exp %7 : vector<8x32xf32>
    %cst_5 = arith.constant 1.000000e+00 : f32
    %9 = vector.broadcast %cst_5 : f32 to vector<8x32xf32>
    %10 = arith.addf %9, %8 : vector<8x32xf32>
    %11 = arith.divf %9, %10 : vector<8x32xf32>
    %12 = arith.truncf %11 : vector<8x32xf32> to vector<8x32xbf16>
    %c0_6 = arith.constant 0 : index
    %c0_7 = arith.constant 0 : index
    %13 = vector.load %arg4[%c0_6, %c0_7] : memref<32x32xbf16, #tpu.memory_space<vmem>>, vector<32x32xbf16>
    %cst_8 = arith.constant dense<0.000000e+00> : vector<8x32xf32>
    %14 = tpu.matmul %12, %13, %cst_8 {dimension_numbers = #tpu.dot_dimension_numbers<[1], [0], [0], [1], [0, 0, 1, 1], [], []>} : vector<8x32xbf16>, vector<32x32xbf16>, vector<8x32xf32> -> vector<8x32xf32>
    %c0_9 = arith.constant 0 : index
    %c0_10 = arith.constant 0 : index
    %15 = vector.load %arg5[%c0_9, %c0_10] : memref<1x32xf32, #tpu.memory_space<vmem>>, vector<1x32xf32>
    %16 = vector.broadcast %15 : vector<1x32xf32> to vector<8x32xf32>
    %17 = arith.addf %14, %16 : vector<8x32xf32>
    %18 = arith.negf %17 : vector<8x32xf32>
    %19 = math.exp %18 : vector<8x32xf32>
    %cst_11 = arith.constant 1.000000e+00 : f32
    %20 = vector.broadcast %cst_11 : f32 to vector<8x32xf32>
    %21 = arith.addf %20, %19 : vector<8x32xf32>
    %22 = arith.divf %20, %21 : vector<8x32xf32>
    %23 = arith.truncf %22 : vector<8x32xf32> to vector<8x32xbf16>
    %c0_12 = arith.constant 0 : index
    %c0_13 = arith.constant 0 : index
    %24 = vector.load %arg6[%c0_12, %c0_13] : memref<32x128xbf16, #tpu.memory_space<vmem>>, vector<32x128xbf16>
    %cst_14 = arith.constant dense<0.000000e+00> : vector<8x128xf32>
    %25 = tpu.matmul %23, %24, %cst_14 {dimension_numbers = #tpu.dot_dimension_numbers<[1], [0], [0], [1], [0, 0, 1, 1], [], []>} : vector<8x32xbf16>, vector<32x128xbf16>, vector<8x128xf32> -> vector<8x128xf32>
    %c0_15 = arith.constant 0 : index
    %c0_16 = arith.constant 0 : index
    %26 = vector.load %arg7[%c0_15, %c0_16] : memref<1x128xf32, #tpu.memory_space<vmem>>, vector<1x128xf32>
    %27 = vector.broadcast %26 : vector<1x128xf32> to vector<8x128xf32>
    %28 = arith.addf %25, %27 : vector<8x128xf32>
    %cst_17 = arith.constant dense<0xFF800000> : vector<8xf32>
    %29 = vector.multi_reduction <maximumf>, %28, %cst_17 [1] : vector<8x128xf32> to vector<8xf32>
    %30 = vector.shape_cast %29 : vector<8xf32> to vector<8x1xf32>
    %31 = vector.broadcast %30 : vector<8x1xf32> to vector<8x128xf32>
    %32 = arith.subf %28, %31 : vector<8x128xf32>
    %33 = math.exp %32 : vector<8x128xf32>
    %cst_18 = arith.constant dense<0.000000e+00> : vector<8xf32>
    %34 = vector.multi_reduction <add>, %33, %cst_18 [1] : vector<8x128xf32> to vector<8xf32>
    %35 = vector.shape_cast %34 : vector<8xf32> to vector<8x1xf32>
    %36 = tpu.reciprocal %35 {approx = true} : vector<8x1xf32> -> vector<8x1xf32>
    %37 = vector.broadcast %36 : vector<8x1xf32> to vector<8x128xf32>
    %38 = arith.mulf %33, %37 : vector<8x128xf32>
    %c0_19 = arith.constant 0 : index
    %c0_20 = arith.constant 0 : index
    %39 = vector.load %arg8[%c0_19, %c0_20] : memref<8x128xf32, #tpu.memory_space<vmem>>, vector<8x128xf32>
    tpu.vector_store %arg8[%c0_19, %c0_20], %38 {strides = array<i32>} : memref<8x128xf32, #tpu.memory_space<vmem>>, vector<8x128xf32>,
    return
  }
  func.func @transform_0(%arg0: i32) -> (i32, i32) {
    %c0_i32 = arith.constant 0 : i32
    %c0_i32_0 = arith.constant 0 : i32
    return %arg0, %c0_i32 : i32, i32
  }
  func.func @transform_1(%arg0: i32) -> (i32, i32) {
    %c0_i32 = arith.constant 0 : i32
    %c0_i32_0 = arith.constant 0 : i32
    %c0_i32_1 = arith.constant 0 : i32
    return %c0_i32, %c0_i32_0 : i32, i32
  }
  func.func @transform_2(%arg0: i32) -> (i32, i32) {
    %c0_i32 = arith.constant 0 : i32
    %c0_i32_0 = arith.constant 0 : i32
    %c0_i32_1 = arith.constant 0 : i32
    return %c0_i32, %c0_i32_0 : i32, i32
  }
  func.func @transform_3(%arg0: i32) -> (i32, i32) {
    %c0_i32 = arith.constant 0 : i32
    %c0_i32_0 = arith.constant 0 : i32
    %c0_i32_1 = arith.constant 0 : i32
    return %c0_i32, %c0_i32_0 : i32, i32
  }
  func.func @transform_4(%arg0: i32) -> (i32, i32) {
    %c0_i32 = arith.constant 0 : i32
    %c0_i32_0 = arith.constant 0 : i32
    %c0_i32_1 = arith.constant 0 : i32
    return %c0_i32, %c0_i32_0 : i32, i32
  }
  func.func @transform_5(%arg0: i32) -> (i32, i32) {
    %c0_i32 = arith.constant 0 : i32
    %c0_i32_0 = arith.constant 0 : i32
    %c0_i32_1 = arith.constant 0 : i32
    return %c0_i32, %c0_i32_0 : i32, i32
  }
  func.func @transform_6(%arg0: i32) -> (i32, i32) {
    %c0_i32 = arith.constant 0 : i32
    %c0_i32_0 = arith.constant 0 : i32
    %c0_i32_1 = arith.constant 0 : i32
    return %c0_i32, %c0_i32_0 : i32, i32
  }
  func.func @transform_7(%arg0: i32) -> (i32, i32) {
    %c0_i32 = arith.constant 0 : i32
    %c0_i32_0 = arith.constant 0 : i32
    return %arg0, %c0_i32 : i32, i32
  }
}

</mosaic_0001>

<llo_original>
// kernel: tpu_custom_call.1
$region0: #{tpu_custom_call.1}
  #allocation0 [shape = 'u32[]', space=smem, size = 0x4, offset = 0x4, fixed_abs, tag = 'smem constant byte address 0x4 - core index']
  #allocation1 [shape = 'u32[144,128]{1,0:T(1,128)}', space=vmem, size = 0x12000, scoped, tag = 'internal scratch']
  %s0 = inlined_call_operand.vmem [shape: f32[8,4], index: 0, kind: input, shape index: {}]
  %s1 = inlined_call_operand.vmem [shape: bf16[4,32], index: 1, kind: input, shape index: {}]
  %s2 = inlined_call_operand.vmem [shape: f32[1,32], index: 2, kind: input, shape index: {}]
  %s3 = inlined_call_operand.vmem [shape: bf16[32,32], index: 3, kind: input, shape index: {}]
  %s4 = inlined_call_operand.vmem [shape: f32[1,32], index: 4, kind: input, shape index: {}]
  %s5 = inlined_call_operand.hbm [shape: bf16[32,128], index: 5, kind: input, shape index: {}]
  %s6 = inlined_call_operand.vmem [shape: f32[1,128], index: 6, kind: input, shape index: {}]
  %s7 = inlined_call_operand.hbm [shape: f32[8,128], index: 7, kind: output, shape index: {}]
  %s8 = sld [smem:[#allocation0]]
  $region42: #{tpu_custom_call.1} parent=0
    _
  %s10 = ssub.s32 1, %s8
  %s11 = scalar_select 0, %s10, %s8
  $region1: #{tpu_custom_call.1} parent=0
    #allocation2 [shape = 'u8[8192]{0}', space=vmem, size = 0x2000, scoped, tag = 'input window, operand 5, single buffered']
    #allocation3 [shape = 's32[1]{0}', space=sflag, size = 0x4, scoped, tag = 'scoped memory for tpu_custom_call.1']
    #allocation4 [shape = 's32[1]{0}', space=sflag, size = 0x4, scoped, tag = 'scoped memory for tpu_custom_call.1']
    #allocation5 [shape = 'u8[4096]{0}', space=vmem, size = 0x1000, scoped, tag = 'output window, operand 0, single buffered']
    %12 = vsyncpa [#allocation3], 0
    %13 = vsyncpa [#allocation4], 0
    // Predicated region
    $region2: #{tpu_custom_call.1} parent=1 // pred_check
      _
    $region3: #{tpu_custom_call.1} parent=1 // pred_check_branch
      %15 = sbr.rel (0) target = $region5
    $region4: #{tpu_custom_call.1} parent=1 // pred_region
      _
    $region5: #{tpu_custom_call.1} parent=1 // pred_fallthru
      _
    // Predicated region
    $region6: #{tpu_custom_call.1} parent=1 // pred_check
      _
    $region7: #{tpu_custom_call.1} parent=1 // pred_check_branch
      %17 = sbr.rel (0) target = $region9
    $region8: #{tpu_custom_call.1} parent=1 // pred_region
      _
    $region9: #{tpu_custom_call.1} parent=1 // pred_fallthru
      _
    // Predicated region
    $region10: #{tpu_custom_call.1} parent=1 // pred_check
      _
    $region11: #{tpu_custom_call.1} parent=1 // pred_check_branch
      %19 = sbr.rel (0) target = $region13
    $region12: #{tpu_custom_call.1} parent=1 // pred_region
      _
    $region13: #{tpu_custom_call.1} parent=1 // pred_fallthru
      _
    // Predicated region
    $region14: #{tpu_custom_call.1} parent=1 // pred_check
      _
    $region15: #{tpu_custom_call.1} parent=1 // pred_check_branch
      %21 = sbr.rel (0) target = $region17
    $region16: #{tpu_custom_call.1} parent=1 // pred_region
      _
    $region17: #{tpu_custom_call.1} parent=1 // pred_fallthru
      _
    // Predicated region
    $region18: #{tpu_custom_call.1} parent=1 // pred_check
      _
    $region19: #{tpu_custom_call.1} parent=1 // pred_check_branch
      %23 = sbr.rel (0) target = $region21
    $region20: #{tpu_custom_call.1} parent=1 // pred_region
      _
    $region21: #{tpu_custom_call.1} parent=1 // pred_fallthru
      _
    // Predicated region
    $region22: #{tpu_custom_call.1} parent=1 // pred_check
      _
    $region23: #{tpu_custom_call.1} parent=1 // pred_check_branch
      %25 = sbr.rel (0) target = $region25
    $region24: #{tpu_custom_call.1} parent=1 // pred_region
      %s27 = ssub.s32 256, 256
      %28 = vsyncadd [#allocation3], %s27
      %s29 = sshll.u32 [#allocation2], 4
      %s30 = int_to_ptr.vmem [resolvable:$true] %s29
      %35 = dma.hbm_to_vmem [thread:$0]  %s5, 256, %s30, [#allocation3], 64, 64, 4
    $region25: #{tpu_custom_call.1} parent=1 // pred_fallthru
      _
    // Predicated region
    $region26: #{tpu_custom_call.1} parent=1 // pred_check
      _
    $region27: #{tpu_custom_call.1} parent=1 // pred_check_branch
      %37 = sbr.rel (0) target = $region29
    $region28: #{tpu_custom_call.1} parent=1 // pred_region
      _
    $region29: #{tpu_custom_call.1} parent=1 // pred_fallthru
      _
    // Predicated region
    $region30: #{tpu_custom_call.1} parent=1 // pred_check
      _
    $region31: #{tpu_custom_call.1} parent=1 // pred_check_branch
      %39 = sbr.rel (0) target = $region33
    $region32: #{tpu_custom_call.1} parent=1 // pred_region
      %40 = dma.done [#allocation3], 256
    $region33: #{tpu_custom_call.1} parent=1 // pred_fallthru
      _
    %v42 = vld [vmem:[%s0] sm:$0xff]
    %v43 = vpack.c.bf16 %v42, %v42
    %v44 = vld [vmem:[%s1] sm:$0x3]
    %v45 = vld [vmem:[%s2] sm:$0x1]
    %v47 = vlaneseq
    %v48 = vshrl.u32 %v47, 7
    %v49 = vsub.s32 0, %v48
    %v50 = vrot.slane %v45, %v49
    %vm52 = vcmask 31744
    %v54 = vsel %vm52, %v43, 0
    %vm56 = vcmask 1041408
    %v58 = vsel %vm56, %v44, 0
    %60 = vmatprep.subr.bf16.mxu0 0
    %61 = vmatpush1.bf16.msra.mxu0 %v58
    %62 = vmatprep.subr.bf16.mxu0 0
    %63 = vmatpush1.bf16.msra.mxu0 0
    %64 = vmatprep.subr.bf16.mxu0 0
    %65 = vmatpush1.bf16.msra.mxu0 0
    %66 = vmatprep.subr.bf16.mxu0 0
    %67 = vmatpush1.bf16.msra.mxu0 0
    %68 = vmatprep.subr.bf16.mxu0 0
    %69 = vmatpush1.bf16.msra.mxu0 0
    %70 = vmatprep.subr.bf16.mxu0 0
    %71 = vmatpush1.bf16.msra.mxu0 0
    %72 = vmatprep.subr.bf16.mxu0 0
    %73 = vmatpush1.bf16.msra.mxu0 0
    %74 = vmatprep.subr.bf16.mxu0 0
    %75 = vmatpush1.bf16.msra.mxu0 0
    %76 = vmatprep.subr.bf16.mxu0 0
    %77 = vmatpush1.bf16.msra.mxu0 0
    %78 = vmatprep.subr.bf16.mxu0 0
    %79 = vmatpush1.bf16.msra.mxu0 0
    %80 = vmatprep.subr.bf16.mxu0 0
    %81 = vmatpush1.bf16.msra.mxu0 0
    %82 = vmatprep.subr.bf16.mxu0 0
    %83 = vmatpush1.bf16.msra.mxu0 0
    %84 = vmatprep.subr.bf16.mxu0 0
    %85 = vmatpush1.bf16.msra.mxu0 0
    %86 = vmatprep.subr.bf16.mxu0 0
    %87 = vmatpush1.bf16.msra.mxu0 0
    %88 = vmatprep.subr.bf16.mxu0 0
    %89 = vmatpush1.bf16.msra.mxu0 0
    %90 = vmatprep.subr.bf16.mxu0 0
    %91 = vmatpush1.bf16.msra.mxu0 0
    %92 = vmatprep.mubr.bf16.mxu0 0
    %93 = vmatmul.mubr.bf16.gmra.mrb[0].mxu0 %v54
    %v94 = vpop.f32.mrb[0].mxu0
    %v95 = vadd.f32 %v50, %v94
    %v96 = vpop.f32.mrb[0].mxu0
    %v97 = vpop.f32.mrb[0].mxu0
    %v98 = vpop.f32.mrb[0].mxu0
    %99 = vdwg.mxu0
    %v100 = vxor.u32 %v95, 2147483648
    %v101 = vmul.f32 %v100, 1.442695
    %v102 = vpow.pop %v101
    %v103 = vadd.f32 %v102, 1.0
    %v104 = vrcp.pop %v103
    %v105 = vmul.f32 1.0, %v104
    %v106 = vpack.c.bf16 %v105, %v105
    %v107 = vld [vmem:[%s3] sm:$0xf]
    %v108 = vld [vmem:[%s3 + $0x4] sm:$0xf]
    %v109 = vld [vmem:[%s3 + $0x8] sm:$0xf]
    %v110 = vld [vmem:[%s3 + $0xc] sm:$0xf]
    %v111 = vld [vmem:[%s4] sm:$0x1]
    %v113 = vlaneseq
    %v114 = vshrl.u32 %v113, 7
    %v115 = vsub.s32 0, %v114
    %v116 = vrot.slane %v111, %v115
    %v122 = vunpack.c.l.b16 %v107
    %v123 = vunpack.c.l.b16 %v108
    %v124 = vunpack.c.l.b16 %v109
    %v125 = vunpack.c.l.b16 %v110
    %v126 = vpack.c.b16 %v123, %v122
    %v127 = vpack.c.b16 %v125, %v124
    %vm130 = vcmask 261120
    %v132 = vsel %vm130, %v106, 0
    %134 = vmatprep.subr.bf16.mxu0 0
    %135 = vmatpush1.bf16.msra.mxu0 %v126
    %136 = vmatprep.subr.bf16.mxu0 0
    %137 = vmatpush1.bf16.msra.mxu0 %v127
    %138 = vmatprep.subr.bf16.mxu0 0
    %139 = vmatpush1.bf16.msra.mxu0 0
    %140 = vmatprep.subr.bf16.mxu0 0
    %141 = vmatpush1.bf16.msra.mxu0 0
    %142 = vmatprep.subr.bf16.mxu0 0
    %143 = vmatpush1.bf16.msra.mxu0 0
    %144 = vmatprep.subr.bf16.mxu0 0
    %145 = vmatpush1.bf16.msra.mxu0 0
    %146 = vmatprep.subr.bf16.mxu0 0
    %147 = vmatpush1.bf16.msra.mxu0 0
    %148 = vmatprep.subr.bf16.mxu0 0
    %149 = vmatpush1.bf16.msra.mxu0 0
    %150 = vmatprep.subr.bf16.mxu0 0
    %151 = vmatpush1.bf16.msra.mxu0 0
    %152 = vmatprep.subr.bf16.mxu0 0
    %153 = vmatpush1.bf16.msra.mxu0 0
    %154 = vmatprep.subr.bf16.mxu0 0
    %155 = vmatpush1.bf16.msra.mxu0 0
    %156 = vmatprep.subr.bf16.mxu0 0
    %157 = vmatpush1.bf16.msra.mxu0 0
    %158 = vmatprep.subr.bf16.mxu0 0
    %159 = vmatpush1.bf16.msra.mxu0 0
    %160 = vmatprep.subr.bf16.mxu0 0
    %161 = vmatpush1.bf16.msra.mxu0 0
    %162 = vmatprep.subr.bf16.mxu0 0
    %163 = vmatpush1.bf16.msra.mxu0 0
    %164 = vmatprep.subr.bf16.mxu0 0
    %165 = vmatpush1.bf16.msra.mxu0 0
    %166 = vmatprep.mubr.bf16.mxu0 0
    %167 = vmatmul.mubr.bf16.gmra.mrb[0].mxu0 %v132
    %v168 = vpop.f32.mrb[0].mxu0
    %v169 = vadd.f32 %v116, %v168
    %v170 = vpop.f32.mrb[0].mxu0
    %v171 = vpop.f32.mrb[0].mxu0
    %v172 = vpop.f32.mrb[0].mxu0
    %173 = vdwg.mxu0
    %v174 = vxor.u32 %v169, 2147483648
    %v175 = vmul.f32 %v174, 1.442695
    %v176 = vpow.pop %v175
    %v177 = vadd.f32 %v176, 1.0
    %v178 = vrcp.pop %v177
    %v179 = vmul.f32 1.0, %v178
    %v180 = vpack.c.bf16 %v179, %v179
    %v181 = vld [vmem:[#allocation2] sm:$0xf]
    %v182 = vld [vmem:[#allocation2 + $0x4] sm:$0xf]
    %v183 = vld [vmem:[#allocation2 + $0x8] sm:$0xf]
    %v184 = vld [vmem:[#allocation2 + $0xc] sm:$0xf]
    %v185 = vld [vmem:[%s6] sm:$0x1]
    %v187 = vlaneseq
    %v188 = vshrl.u32 %v187, 7
    %v189 = vsub.s32 0, %v188
    %v190 = vrot.slane %v185, %v189
    %v196 = vunpack.c.l.b16 %v181
    %v197 = vunpack.c.l.b16 %v182
    %v198 = vunpack.c.l.b16 %v183
    %v199 = vunpack.c.l.b16 %v184
    %v200 = vpack.c.b16 %v197, %v196
    %v201 = vpack.c.b16 %v199, %v198
    %v205 = vsel %vm130, %v180, 0
    %207 = vmatprep.subr.bf16.mxu0 0
    %208 = vmatpush1.bf16.msra.mxu0 %v200
    %209 = vmatprep.subr.bf16.mxu0 0
    %210 = vmatpush1.bf16.msra.mxu0 %v201
    %211 = vmatprep.subr.bf16.mxu0 0
    %212 = vmatpush1.bf16.msra.mxu0 0
    %213 = vmatprep.subr.bf16.mxu0 0
    %214 = vmatpush1.bf16.msra.mxu0 0
    %215 = vmatprep.subr.bf16.mxu0 0
    %216 = vmatpush1.bf16.msra.mxu0 0
    %217 = vmatprep.subr.bf16.mxu0 0
    %218 = vmatpush1.bf16.msra.mxu0 0
    %219 = vmatprep.subr.bf16.mxu0 0
    %220 = vmatpush1.bf16.msra.mxu0 0
    %221 = vmatprep.subr.bf16.mxu0 0
    %222 = vmatpush1.bf16.msra.mxu0 0
    %223 = vmatprep.subr.bf16.mxu0 0
    %224 = vmatpush1.bf16.msra.mxu0 0
    %225 = vmatprep.subr.bf16.mxu0 0
    %226 = vmatpush1.bf16.msra.mxu0 0
    %227 = vmatprep.subr.bf16.mxu0 0
    %228 = vmatpush1.bf16.msra.mxu0 0
    %229 = vmatprep.subr.bf16.mxu0 0
    %230 = vmatpush1.bf16.msra.mxu0 0
    %231 = vmatprep.subr.bf16.mxu0 0
    %232 = vmatpush1.bf16.msra.mxu0 0
    %233 = vmatprep.subr.bf16.mxu0 0
    %234 = vmatpush1.bf16.msra.mxu0 0
    %235 = vmatprep.subr.bf16.mxu0 0
    %236 = vmatpush1.bf16.msra.mxu0 0
    %237 = vmatprep.subr.bf16.mxu0 0
    %238 = vmatpush1.bf16.msra.mxu0 0
    %239 = vmatprep.mubr.bf16.mxu0 0
    %240 = vmatmul.mubr.bf16.gmra.mrb[0].mxu0 %v205
    %v241 = vpop.f32.mrb[0].mxu0
    %v242 = vadd.f32 %v190, %v241
    %v243 = vpop.f32.mrb[0].mxu0
    %v244 = vpop.f32.mrb[0].mxu0
    %v245 = vpop.f32.mrb[0].mxu0
    %246 = vdwg.mxu0
    %247 = vmax.xlane.f32.xlu0 %v242
    %v248 = vpop.xlane.xlu0 %247
    %v249 = vsub.f32 %v242, %v248
    %v250 = vmul.f32 %v249, 1.442695
    %v251 = vpow.pop %v250
    %252 = vadd.xlane.f32.xlu0 %v251
    %v253 = vpop.xlane.xlu0 %252
    %v254 = vrcp.pop %v253
    %v255 = vmul.f32 %v251, %v254
    %256 = vst [vmem:[#allocation5] sm:$0xff] %v255
    // Predicated region
    $region34: #{tpu_custom_call.1} parent=1 // pred_check
      _
    $region35: #{tpu_custom_call.1} parent=1 // pred_check_branch
      %258 = sbr.rel (0) target = $region37
    $region36: #{tpu_custom_call.1} parent=1 // pred_region
      %s260 = ssub.s32 128, 128
      %261 = vsyncadd [#allocation4], %s260
      %s263 = sshll.u32 [#allocation5], 4
      %s264 = int_to_ptr.vmem [resolvable:$true] %s263
      %266 = dma.vmem_to_hbm [thread:$0]  %s264, 128, %s7, [#allocation4]
    $region37: #{tpu_custom_call.1} parent=1 // pred_fallthru
      _
    // Predicated region
    $region38: #{tpu_custom_call.1} parent=1 // pred_check
      _
    $region39: #{tpu_custom_call.1} parent=1 // pred_check_branch
      %268 = sbr.rel (0) target = $region41
    $region40: #{tpu_custom_call.1} parent=1 // pred_region
      %269 = dma.done [#allocation4], 128
    $region41: #{tpu_custom_call.1} parent=1 // pred_fallthru
      _
    %270 = vsyncpa [#allocation3], 1
    %271 = vsyncpa [#allocation4], 1

</llo_original>
